<compile_context>
chip_gen: v7x
topology: tpu7x:2x2x1
jax: 0.10.0
libtpu: 0.0.40
codegen_flags: <defaults>
</compile_context>

<pallas_src>
import jax
import jax.numpy as jnp
from jax.experimental import pallas as pl
from jax.experimental.pallas import tpu as pltpu


def _round_up(x, m):
    return (x + m - 1) // m * m


def splade_values_kernel(h_ref, w_ref, b_ref, m_ref, out_ref):
    # h_ref  : (TB, TS, H)  bf16  hidden-state tile (MXU lhs after flatten)
    # w_ref  : (H, TV)      bf16  MLM-head weight tile (MXU rhs)
    # b_ref  : (1, TV)      f32   bias tile
    # m_ref  : (TB, TS, 1)  f32   attention-mask tile
    # out_ref: (TB, TV)     f32   running seq-max, resident across the S axis
    tb, ts, h = h_ref.shape
    s_idx = pl.program_id(2)

    # Real MXU matmul: M = TB*TS, K = H, N = TV, f32 accumulation.
    logits = jnp.dot(h_ref[...].reshape(tb * ts, h), w_ref[...],
                     preferred_element_type=jnp.float32)           # (TB*TS, TV)
    logits = logits + b_ref[...]
    act = jnp.log1p(jnp.maximum(logits, 0.0))                      # f32 VPU/EUP
    act = act.reshape(tb, ts, -1) * m_ref[...]                     # zero masked tokens
    chunk_max = jnp.max(act, axis=1)                               # (TB, TV)

    # log1p(relu(.)) >= 0 and masked/padded tokens contribute exactly 0, so a
    # zero init is the identity for the running max.
    @pl.when(s_idx == 0)
    def _():
        out_ref[...] = jnp.zeros_like(out_ref)

    out_ref[...] = jnp.maximum(out_ref[...], chunk_max)


def splade_forward(input_ids, attention_mask, embed, w, b, top_k=64,
                   block_v=2048, block_s=128, block_b=8,
                   compute_dtype=jnp.bfloat16):
    B, S = input_ids.shape
    H, V = w.shape

    # glue: embedding lookup stands in for the injected transformer backbone
    hidden = embed[input_ids].astype(compute_dtype)                # [B, S, H]
    mask3 = attention_mask.astype(jnp.float32)[..., None]          # [B, S, 1]

    # ---- tile sizes ----------------------------------------------------
    tb = B if (B <= block_b or B % block_b != 0) else block_b      # batch tile
    ts = min(block_s, _round_up(S, 8))                             # seq tile
    s_pad = _round_up(S, ts)
    tv = min(block_v, _round_up(V, 128))                           # vocab tile
    v_pad = _round_up(V, tv)

    # ---- padding: zeros are neutral for every fused op ------------------
    if s_pad != S:
        hidden = jnp.pad(hidden, ((0, 0), (0, s_pad - S), (0, 0)))
        mask3 = jnp.pad(mask3, ((0, 0), (0, s_pad - S), (0, 0)))
    w_p = jnp.pad(w, ((0, 0), (0, v_pad - V))).astype(compute_dtype)      # [H, Vp]
    b_p = jnp.pad(jnp.reshape(b, (1, V)).astype(jnp.float32),
                  ((0, 0), (0, v_pad - V)))                               # [1, Vp]

    num_v = v_pad // tv
    num_b = B // tb
    num_s = s_pad // ts

    values = pl.pallas_call(
        splade_values_kernel,
        out_shape=jax.ShapeDtypeStruct((B, v_pad), jnp.float32),
        # V tiles outermost -> each weight tile is fetched from HBM once and
        # reused across every (batch, seq) tile; the seq reduction axis is
        # innermost with the output block resident across it.
        grid=(num_v, num_b, num_s),
        in_specs=[
            pl.BlockSpec((tb, ts, H), lambda j, i, s: (i, s, 0)),   # hidden
            pl.BlockSpec((H, tv),     lambda j, i, s: (0, j)),      # weight tile
            pl.BlockSpec((1, tv),     lambda j, i, s: (0, j)),      # bias tile
            pl.BlockSpec((tb, ts, 1), lambda j, i, s: (i, s, 0)),   # mask
        ],
        out_specs=pl.BlockSpec((tb, tv), lambda j, i, s: (i, j)),   # dense slab
        compiler_params=pltpu.CompilerParams(
            dimension_semantics=("parallel", "parallel", "arbitrary"),
            vmem_limit_bytes=48 * 1024 * 1024,
        ),
    )(hidden, w_p, b_p, mask3)

    values = values[:, :V]                         # drop padded vocab lanes

    # TODO(synk): top-k selection (sort) has no clean Mosaic lowering; the
    # k-th-largest threshold + trivially mem-bound compare/mul gating stay in
    # plain JAX (XLA fuses them with the top_k consumer for free).
    top_values = jax.lax.top_k(values, top_k)[0]
    threshold = top_values[..., -1:]                               # [B, 1]
    return values * (values >= threshold).astype(values.dtype)


if __name__ == "__main__":
    B, S, H, V, TOP_K = 2, 8, 32, 256, 64
    VOCAB_IN = 100

    key = jax.random.PRNGKey(0)
    k1, k2, k3 = jax.random.split(key, 3)

    # deterministic synthetic "transformer" parameters
    embed = jax.random.normal(k1, (VOCAB_IN, H), jnp.float32) * 0.5
    w = jax.random.normal(k2, (H, V), jnp.float32) * 0.5
    b = jnp.zeros((1, V), jnp.float32)

    input_ids = jax.random.randint(k3, (B, S), 0, VOCAB_IN)
    lengths = jnp.array([S, S - 3])
    attention_mask = (jnp.arange(S)[None, :] < lengths[:, None]).astype(jnp.float32)

    out = splade_forward(input_ids, attention_mask, embed, w, b, top_k=TOP_K)
    out = jax.block_until_ready(out)

    # plain-JAX reference matching the PyTorch semantics (same bf16 operands /
    # f32 accumulation as the kernel so the comparison is apples-to-apples).
    hidden_ref = embed[input_ids].astype(jnp.bfloat16)
    logits = jnp.dot(hidden_ref.reshape(B * S, H), w.astype(jnp.bfloat16),
                     preferred_element_type=jnp.float32).reshape(B, S, V) + b
    act = jnp.log1p(jax.nn.relu(logits)) * attention_mask[..., None]
    vals = jnp.max(act, axis=1)
    thr = jax.lax.top_k(vals, TOP_K)[0][..., -1:]
    ref = vals * (vals >= thr).astype(vals.dtype)

    assert out.shape == (B, V)
    assert jnp.allclose(out, ref, atol=1e-4, rtol=1e-4), \
        "kernel output mismatch vs reference"
    print("KERNEL_OK")
</pallas_src>

<mosaic_0001>
module attributes {stable_mosaic.version = 11 : i64} {
  func.func @splade_values_kernel(%arg0: i32, %arg1: i32, %arg2: i32, %arg3: memref<2x8x32xbf16, #tpu.memory_space<vmem>>, %arg4: memref<32x256xbf16, #tpu.memory_space<vmem>>, %arg5: memref<1x256xf32, #tpu.memory_space<vmem>>, %arg6: memref<2x8x1xf32, #tpu.memory_space<vmem>>, %arg7: memref<2x256xf32, #tpu.memory_space<vmem>>) attributes {dimension_semantics = [#tpu.dimension_semantics<parallel>, #tpu.dimension_semantics<parallel>, #tpu.dimension_semantics<arbitrary>], iteration_bounds = array<i64: 1, 1, 1>, scalar_prefetch = 0 : i64, scratch_operands = 0 : i64, tpu.core_type = #tpu.core_type<tc>, window_params = [{transform_indices = @transform_0, window_bounds = array<i64: 2, 8, 32>}, {transform_indices = @transform_1, window_bounds = array<i64: 32, 256>}, {transform_indices = @transform_2, window_bounds = array<i64: 1, 256>}, {transform_indices = @transform_3, window_bounds = array<i64: 2, 8, 1>}, {transform_indices = @transform_4, window_bounds = array<i64: 2, 256>}]} {
    %c0 = arith.constant 0 : index
    %c0_0 = arith.constant 0 : index
    %c0_1 = arith.constant 0 : index
    %0 = vector.load %arg3[%c0, %c0_0, %c0_1] : memref<2x8x32xbf16, #tpu.memory_space<vmem>>, vector<2x8x32xbf16>
    %1 = vector.shape_cast %0 : vector<2x8x32xbf16> to vector<16x32xbf16>
    %c0_2 = arith.constant 0 : index
    %c0_3 = arith.constant 0 : index
    %2 = vector.load %arg4[%c0_2, %c0_3] : memref<32x256xbf16, #tpu.memory_space<vmem>>, vector<32x256xbf16>
    %cst = arith.constant dense<0.000000e+00> : vector<16x256xf32>
    %3 = tpu.matmul %1, %2, %cst {dimension_numbers = #tpu.dot_dimension_numbers<[1], [0], [0], [1], [0, 0, 1, 1], [], []>} : vector<16x32xbf16>, vector<32x256xbf16>, vector<16x256xf32> -> vector<16x256xf32>
    %c0_4 = arith.constant 0 : index
    %c0_5 = arith.constant 0 : index
    %4 = vector.load %arg5[%c0_4, %c0_5] : memref<1x256xf32, #tpu.memory_space<vmem>>, vector<1x256xf32>
    %5 = vector.broadcast %4 : vector<1x256xf32> to vector<16x256xf32>
    %6 = arith.addf %3, %5 : vector<16x256xf32>
    %cst_6 = arith.constant 0.000000e+00 : f32
    %7 = vector.broadcast %cst_6 : f32 to vector<16x256xf32>
    %8 = arith.maximumf %6, %7 : vector<16x256xf32>
    %9 = math.log1p %8 : vector<16x256xf32>
    %10 = vector.shape_cast %9 : vector<16x256xf32> to vector<2x8x256xf32>
    %c0_7 = arith.constant 0 : index
    %c0_8 = arith.constant 0 : index
    %c0_9 = arith.constant 0 : index
    %11 = vector.load %arg6[%c0_7, %c0_8, %c0_9] : memref<2x8x1xf32, #tpu.memory_space<vmem>>, vector<2x8x1xf32>
    %12 = vector.broadcast %11 : vector<2x8x1xf32> to vector<2x8x256xf32>
    %13 = arith.mulf %10, %12 : vector<2x8x256xf32>
    %cst_10 = arith.constant dense<0xFF800000> : vector<2x256xf32>
    %14 = vector.multi_reduction <maximumf>, %13, %cst_10 [1] : vector<2x8x256xf32> to vector<2x256xf32>
    %c0_i32 = arith.constant 0 : i32
    %15 = arith.cmpi eq, %arg2, %c0_i32 : i32
    %16 = arith.extui %15 : i1 to i32
    %c0_i32_11 = arith.constant 0 : i32
    %17 = arith.cmpi ne, %16, %c0_i32_11 : i32
    scf.if %17 {
      %cst_16 = arith.constant 0.000000e+00 : f32
      %21 = vector.broadcast %cst_16 : f32 to vector<2x256xf32>
      %c0_17 = arith.constant 0 : index
      %c0_18 = arith.constant 0 : index
      %22 = vector.load %arg7[%c0_17, %c0_18] : memref<2x256xf32, #tpu.memory_space<vmem>>, vector<2x256xf32>
      tpu.vector_store %arg7[%c0_17, %c0_18], %21 {strides = array<i32>} : memref<2x256xf32, #tpu.memory_space<vmem>>, vector<2x256xf32>,
    } else {
    }
    %c0_12 = arith.constant 0 : index
    %c0_13 = arith.constant 0 : index
    %18 = vector.load %arg7[%c0_12, %c0_13] : memref<2x256xf32, #tpu.memory_space<vmem>>, vector<2x256xf32>
    %19 = arith.maximumf %18, %14 : vector<2x256xf32>
    %c0_14 = arith.constant 0 : index
    %c0_15 = arith.constant 0 : index
    %20 = vector.load %arg7[%c0_14, %c0_15] : memref<2x256xf32, #tpu.memory_space<vmem>>, vector<2x256xf32>
    tpu.vector_store %arg7[%c0_14, %c0_15], %19 {strides = array<i32>} : memref<2x256xf32, #tpu.memory_space<vmem>>, vector<2x256xf32>,
    return
  }
  func.func @transform_0(%arg0: i32, %arg1: i32, %arg2: i32) -> (i32, i32, i32) {
    %c0_i32 = arith.constant 0 : i32
    %c0_i32_0 = arith.constant 0 : i32
    return %arg1, %arg2, %c0_i32 : i32, i32, i32
  }
  func.func @transform_1(%arg0: i32, %arg1: i32, %arg2: i32) -> (i32, i32) {
    %c0_i32 = arith.constant 0 : i32
    %c0_i32_0 = arith.constant 0 : i32
    return %c0_i32, %arg0 : i32, i32
  }
  func.func @transform_2(%arg0: i32, %arg1: i32, %arg2: i32) -> (i32, i32) {
    %c0_i32 = arith.constant 0 : i32
    %c0_i32_0 = arith.constant 0 : i32
    return %c0_i32, %arg0 : i32, i32
  }
  func.func @transform_3(%arg0: i32, %arg1: i32, %arg2: i32) -> (i32, i32, i32) {
    %c0_i32 = arith.constant 0 : i32
    %c0_i32_0 = arith.constant 0 : i32
    return %arg1, %arg2, %c0_i32 : i32, i32, i32
  }
  func.func @transform_4(%arg0: i32, %arg1: i32, %arg2: i32) -> (i32, i32) {
    %c0_i32 = arith.constant 0 : i32
    return %arg1, %arg0 : i32, i32
  }
}

</mosaic_0001>

<llo_original>
// kernel: tpu_custom_call.1
$region0: #{tpu_custom_call.1}
  #allocation0 [shape = 'u32[]', space=smem, size = 0x4, offset = 0x4, fixed_abs, tag = 'smem constant byte address 0x4 - core index']
  #allocation1 [shape = 'u32[144,128]{1,0:T(1,128)}', space=vmem, size = 0x12000, scoped, tag = 'internal scratch']
  %s0 = inlined_call_operand.vmem [shape: bf16[2,8,32], index: 0, kind: input, shape index: {}]
  %s1 = inlined_call_operand.hbm [shape: bf16[32,256], index: 1, kind: input, shape index: {}]
  %s2 = inlined_call_operand.vmem [shape: f32[1,256], index: 2, kind: input, shape index: {}]
  %s3 = inlined_call_operand.vmem [shape: f32[2,8,1], index: 3, kind: input, shape index: {}]
  %s4 = inlined_call_operand.hbm [shape: f32[2,256], index: 4, kind: output, shape index: {}]
  %s5 = sld [smem:[#allocation0]]
  $region34: #{tpu_custom_call.1} parent=0
    _
  %s7 = ssub.s32 1, %s5
  %s8 = scalar_select 0, %s7, %s5
  $region1: #{tpu_custom_call.1} parent=0
    #allocation2 [shape = 'u8[16384]{0}', space=vmem, size = 0x4000, scoped, tag = 'input window, operand 1, single buffered']
    #allocation3 [shape = 's32[1]{0}', space=sflag, size = 0x4, scoped, tag = 'scoped memory for tpu_custom_call.1']
    #allocation4 [shape = 's32[1]{0}', space=sflag, size = 0x4, scoped, tag = 'scoped memory for tpu_custom_call.1']
    #allocation5 [shape = 'u8[2048]{0}', space=vmem, size = 0x800, scoped, tag = 'output window, operand 0, single buffered']
    %9 = vsyncpa [#allocation3], 0
    %10 = vsyncpa [#allocation4], 0
    // Predicated region
    $region2: #{tpu_custom_call.1} parent=1 // pred_check
      _
    $region3: #{tpu_custom_call.1} parent=1 // pred_check_branch
      %12 = sbr.rel (0) target = $region5
    $region4: #{tpu_custom_call.1} parent=1 // pred_region
      _
    $region5: #{tpu_custom_call.1} parent=1 // pred_fallthru
      _
    // Predicated region
    $region6: #{tpu_custom_call.1} parent=1 // pred_check
      _
    $region7: #{tpu_custom_call.1} parent=1 // pred_check_branch
      %14 = sbr.rel (0) target = $region9
    $region8: #{tpu_custom_call.1} parent=1 // pred_region
      %s16 = ssub.s32 512, 512
      %17 = vsyncadd [#allocation3], %s16
      %s18 = sshll.u32 [#allocation2], 4
      %s19 = int_to_ptr.vmem [resolvable:$true] %s18
      %24 = dma.hbm_to_vmem [thread:$0]  %s1, 512, %s19, [#allocation3], 128, 128, 8
    $region9: #{tpu_custom_call.1} parent=1 // pred_fallthru
      _
    // Predicated region
    $region10: #{tpu_custom_call.1} parent=1 // pred_check
      _
    $region11: #{tpu_custom_call.1} parent=1 // pred_check_branch
      %26 = sbr.rel (0) target = $region13
    $region12: #{tpu_custom_call.1} parent=1 // pred_region
      _
    $region13: #{tpu_custom_call.1} parent=1 // pred_fallthru
      _
    // Predicated region
    $region14: #{tpu_custom_call.1} parent=1 // pred_check
      _
    $region15: #{tpu_custom_call.1} parent=1 // pred_check_branch
      %28 = sbr.rel (0) target = $region17
    $region16: #{tpu_custom_call.1} parent=1 // pred_region
      _
    $region17: #{tpu_custom_call.1} parent=1 // pred_fallthru
      _
    // Predicated region
    $region18: #{tpu_custom_call.1} parent=1 // pred_check
      _
    $region19: #{tpu_custom_call.1} parent=1 // pred_check_branch
      %30 = sbr.rel (0) target = $region21
    $region20: #{tpu_custom_call.1} parent=1 // pred_region
      %31 = dma.done [#allocation3], 512
    $region21: #{tpu_custom_call.1} parent=1 // pred_fallthru
      _
    %v33 = vld [vmem:[%s0] sm:$0xf]
    %v34 = vld [vmem:[%s0 + $0x4] sm:$0xf]
    %v35 = vld [vmem:[#allocation2] sm:$0xff]
    %v36 = vld [vmem:[#allocation2 + $0x8] sm:$0xff]
    %v37 = vld [vmem:[#allocation2 + $0x10] sm:$0xff]
    %v38 = vld [vmem:[#allocation2 + $0x18] sm:$0xff]
    %v39 = vld [vmem:[%s2] sm:$0x3]
    %v41 = vlaneseq
    %v42 = vshrl.u32 %v41, 7
    %v43 = vsub.s32 0, %v42
    %v44 = vrot.slane %v39, %v43
    %v45 = vlaneseq
    %v46 = vshrl.u32 %v45, 7
    %v47 = vsub.s32 1, %v46
    %v48 = vrot.slane %v39, %v47
    %v53 = vunpack.c.l.b16 %v33
    %v54 = vunpack.c.l.b16 %v34
    %v55 = vpack.c.b16 %v54, %v53
    %v60 = vunpack.c.l.b16 %v35
    %v61 = vunpack.c.h.b16 %v35
    %v62 = vunpack.c.l.b16 %v36
    %v63 = vunpack.c.h.b16 %v36
    %v64 = vunpack.c.l.b16 %v37
    %v65 = vunpack.c.h.b16 %v37
    %v66 = vunpack.c.l.b16 %v38
    %v67 = vunpack.c.h.b16 %v38
    %v68 = vpack.c.b16 %v62, %v60
    %v69 = vpack.c.b16 %v63, %v61
    %v70 = vpack.c.b16 %v66, %v64
    %v71 = vpack.c.b16 %v67, %v65
    %vm76 = vcmask 261120
    %v78 = vsel %vm76, %v55, 0
    %80 = vmatprep.subr.bf16.mxu0 %v69
    %81 = vmatpush1.bf16.msra.mxu0 %v68
    %82 = vmatprep.subr.bf16.mxu0 %v71
    %83 = vmatpush1.bf16.msra.mxu0 %v70
    %84 = vmatprep.subr.bf16.mxu0 0
    %85 = vmatpush1.bf16.msra.mxu0 0
    %86 = vmatprep.subr.bf16.mxu0 0
    %87 = vmatpush1.bf16.msra.mxu0 0
    %88 = vmatprep.subr.bf16.mxu0 0
    %89 = vmatpush1.bf16.msra.mxu0 0
    %90 = vmatprep.subr.bf16.mxu0 0
    %91 = vmatpush1.bf16.msra.mxu0 0
    %92 = vmatprep.subr.bf16.mxu0 0
    %93 = vmatpush1.bf16.msra.mxu0 0
    %94 = vmatprep.subr.bf16.mxu0 0
    %95 = vmatpush1.bf16.msra.mxu0 0
    %96 = vmatprep.subr.bf16.mxu0 0
    %97 = vmatpush1.bf16.msra.mxu0 0
    %98 = vmatprep.subr.bf16.mxu0 0
    %99 = vmatpush1.bf16.msra.mxu0 0
    %100 = vmatprep.subr.bf16.mxu0 0
    %101 = vmatpush1.bf16.msra.mxu0 0
    %102 = vmatprep.subr.bf16.mxu0 0
    %103 = vmatpush1.bf16.msra.mxu0 0
    %104 = vmatprep.subr.bf16.mxu0 0
    %105 = vmatpush1.bf16.msra.mxu0 0
    %106 = vmatprep.subr.bf16.mxu0 0
    %107 = vmatpush1.bf16.msra.mxu0 0
    %108 = vmatprep.subr.bf16.mxu0 0
    %109 = vmatpush1.bf16.msra.mxu0 0
    %110 = vmatprep.subr.bf16.mxu0 0
    %111 = vmatpush1.bf16.msra.mxu0 0
    %112 = vmatprep.mubr.bf16.mxu0 0
    %113 = vmatmul.mubr.bf16.gmra.mrb[0].mxu0 %v78
    %v114 = vpop.f32.mrb[0].mxu0
    %v115 = vadd.f32 %v44, %v114
    %v116 = vpop.f32.mrb[0].mxu0
    %v117 = vadd.f32 %v48, %v116
    %v118 = vpop.f32.mrb[0].mxu0
    %v119 = vadd.f32 %v44, %v118
    %v120 = vpop.f32.mrb[0].mxu0
    %v121 = vadd.f32 %v48, %v120
    %122 = vdwg.mxu0
    %v123 = vmax.f32 %v115, 0.0
    %v124 = vmax.f32 %v117, 0.0
    %v125 = vmax.f32 %v119, 0.0
    %v126 = vmax.f32 %v121, 0.0
    %v127 = vadd.f32 %v123, 1.0
    %v128 = vlog2.pop %v127
    %v129 = vmul.f32 %v128, 0.6931472
    %v130 = vmul.f32 -0.5, %v123
    %v131 = vadd.f32 %v130, 1.0
    %v132 = vmul.f32 %v131, %v123
    %v133 = vand.u32 2147483647, %v123
    %vm134 = vcmp.lt.f32.partialorder %v133, 0.0004427343
    %v135 = vsel %vm134, %v132, %v129
    %v136 = vadd.f32 %v124, 1.0
    %v137 = vlog2.pop %v136
    %v138 = vmul.f32 %v137, 0.6931472
    %v139 = vmul.f32 -0.5, %v124
    %v140 = vadd.f32 %v139, 1.0
    %v141 = vmul.f32 %v140, %v124
    %v142 = vand.u32 2147483647, %v124
    %vm143 = vcmp.lt.f32.partialorder %v142, 0.0004427343
    %v144 = vsel %vm143, %v141, %v138
    %v145 = vadd.f32 %v125, 1.0
    %v146 = vlog2.pop %v145
    %v147 = vmul.f32 %v146, 0.6931472
    %v148 = vmul.f32 -0.5, %v125
    %v149 = vadd.f32 %v148, 1.0
    %v150 = vmul.f32 %v149, %v125
    %v151 = vand.u32 2147483647, %v125
    %vm152 = vcmp.lt.f32.partialorder %v151, 0.0004427343
    %v153 = vsel %vm152, %v150, %v147
    %v154 = vadd.f32 %v126, 1.0
    %v155 = vlog2.pop %v154
    %v156 = vmul.f32 %v155, 0.6931472
    %v157 = vmul.f32 -0.5, %v126
    %v158 = vadd.f32 %v157, 1.0
    %v159 = vmul.f32 %v158, %v126
    %v160 = vand.u32 2147483647, %v126
    %vm161 = vcmp.lt.f32.partialorder %v160, 0.0004427343
    %v162 = vsel %vm161, %v159, %v156
    %v163 = vld [vmem:[%s3] sm:$0xff]
    %v164 = vld [vmem:[%s3 + $0x8] sm:$0xff]
    %166 = vset.pattern.permute.xlu0 0
    %167 = vperm.xlu0 %166, %v163
    %v168 = vpop.permute.xlu0 %167
    %171 = vset.pattern.permute.xlu0 0
    %172 = vperm.xlu0 %171, %v164
    %v173 = vpop.permute.xlu0 %172
    %v175 = vmul.f32 %v135, %v168
    %v176 = vmul.f32 %v144, %v168
    %v177 = vmul.f32 %v153, %v173
    %v178 = vmul.f32 %v162, %v173
    %v179 = vrot.slane %v175, 4
    %v180 = vmax.f32 %v175, %v179
    %v181 = vrot.slane %v180, 2
    %v182 = vmax.f32 %v180, %v181
    %v183 = vrot.slane %v182, 1
    %v184 = vmax.f32 %v182, %v183
    %v185 = vrot.slane %v176, 4
    %v186 = vmax.f32 %v176, %v185
    %v187 = vrot.slane %v186, 2
    %v188 = vmax.f32 %v186, %v187
    %v189 = vrot.slane %v188, 1
    %v190 = vmax.f32 %v188, %v189
    %v191 = vrot.slane %v177, 4
    %v192 = vmax.f32 %v177, %v191
    %v193 = vrot.slane %v192, 2
    %v194 = vmax.f32 %v192, %v193
    %v195 = vrot.slane %v194, 1
    %v196 = vmax.f32 %v194, %v195
    %v197 = vrot.slane %v178, 4
    %v198 = vmax.f32 %v178, %v197
    %v199 = vrot.slane %v198, 2
    %v200 = vmax.f32 %v198, %v199
    %v201 = vrot.slane %v200, 1
    %v202 = vmax.f32 %v200, %v201
    %p203 = scmp.eq.s32.totalorder 0, 0
    // Predicated region
    $region22: #{tpu_custom_call.1} parent=1 // pred_check
      %p204 = pneg %p203
    $region23: #{tpu_custom_call.1} parent=1 // pred_check_branch
      %206 = sbr.rel (%p204) target = $region25
    $region24: #{tpu_custom_call.1} parent=1 // pred_region
      %207 = vst [vmem:[#allocation5] sm:$0xf] 0.0
    $region25: #{tpu_custom_call.1} parent=1 // pred_fallthru
      _
    %v208 = vld [vmem:[#allocation5] sm:$0xf]
    %v213 = vcombine.low %v184, %v190
    %v215 = vunpack.c.l.s4 1983009808
    %v216 = vunpack.c.0.s8 %v215
    %v217 = vlaneseq
    %v218 = vshrl.u32 %v217, 7
    %v219 = vsub.s32 %v216, %v218
    %v220 = vrot.slane %v213, %v219
    %v221 = vcombine.low %v196, %v202
    %v223 = vunpack.c.l.s4 1983009808
    %v224 = vunpack.c.0.s8 %v223
    %v225 = vlaneseq
    %v226 = vshrl.u32 %v225, 7
    %v227 = vsub.s32 %v224, %v226
    %v228 = vrot.slane %v221, %v227
    %vm229 = vcmask 1044484
    %v230 = vsel %vm229, %v220, %v220
    %vm231 = vcmask 1046534
    %v232 = vsel %vm231, %v220, %v230
    %v233 = vrot.slane %v228, 7
    %vm234 = vcmask 1041409
    %v235 = vsel %vm234, %v233, %v232
    %vm236 = vcmask 1043459
    %v237 = vsel %vm236, %v233, %v235
    %vm238 = vcmask 1045509
    %v239 = vsel %vm238, %v233, %v237
    %vm240 = vcmask 1047559
    %v241 = vsel %vm240, %v233, %v239
    %v243 = vmax.f32 %v208, %v241
    %244 = vst [vmem:[#allocation5] sm:$0xf] %v243
    // Predicated region
    $region26: #{tpu_custom_call.1} parent=1 // pred_check
      _
    $region27: #{tpu_custom_call.1} parent=1 // pred_check_branch
      %246 = sbr.rel (0) target = $region29
    $region28: #{tpu_custom_call.1} parent=1 // pred_region
      %s248 = ssub.s32 64, 64
      %249 = vsyncadd [#allocation4], %s248
      %s251 = sshll.u32 [#allocation5], 4
      %s252 = int_to_ptr.vmem [resolvable:$true] %s251
      %254 = dma.vmem_to_hbm [thread:$0]  %s252, 64, %s4, [#allocation4]
    $region29: #{tpu_custom_call.1} parent=1 // pred_fallthru
      _
    // Predicated region
    $region30: #{tpu_custom_call.1} parent=1 // pred_check
      _
    $region31: #{tpu_custom_call.1} parent=1 // pred_check_branch
      %256 = sbr.rel (0) target = $region33
    $region32: #{tpu_custom_call.1} parent=1 // pred_region
      %257 = dma.done [#allocation4], 64
    $region33: #{tpu_custom_call.1} parent=1 // pred_fallthru
      _
    %258 = vsyncpa [#allocation3], 1
    %259 = vsyncpa [#allocation4], 1

</llo_original>
